<compile_context>
chip_gen: v6e
topology: v6e:2x2x1
jax: 0.10.0
libtpu: 0.0.40
codegen_flags: <defaults>
</compile_context>

<pallas_src>
import functools

import jax
import jax.numpy as jnp
from jax import lax
from jax.experimental import pallas as pl
from jax.experimental.pallas import tpu as pltpu


def _bn_stats_kernel(x_ref, gb_ref, ss_ref, acc_ref, *, m_tile, inv_m, eps):
    """Pass 1: accumulate per-feature mean/M2 over M tiles, finalize scale/shift.

    x_ref:   (m_tile, F) current row tile
    gb_ref:  (2, F)      row 0 = gamma, row 1 = beta
    ss_ref:  (2, F)      output: row 0 = scale, row 1 = shift
    acc_ref: (2, F)      scratch: row 0 = running mean, row 1 = running M2
    """
    i = pl.program_id(0)

    @pl.when(i == 0)
    def _():
        acc_ref[...] = jnp.zeros_like(acc_ref)

    xb = x_ref[...]                                                  # (m_tile, F)
    tile_mean = jnp.sum(xb, axis=0, keepdims=True) * (1.0 / m_tile)  # (1, F)
    xc = xb - tile_mean
    tile_m2 = jnp.sum(xc * xc, axis=0, keepdims=True)                # (1, F)

    # Chan's parallel-variance combine with equal-sized tiles:
    #   n_a = i * m_tile (already accumulated), n_b = m_tile (this tile).
    i_f = i.astype(jnp.float32)
    delta = tile_mean - acc_ref[0:1, :]
    acc_ref[0:1, :] += delta * (1.0 / (i_f + 1.0))
    acc_ref[1:2, :] += tile_m2 + (delta * delta) * (
        i_f * float(m_tile) / (i_f + 1.0))

    @pl.when(i == pl.num_programs(0) - 1)
    def _():
        mean = acc_ref[0:1, :]
        var = acc_ref[1:2, :] * inv_m                  # biased variance
        inv_std = lax.rsqrt(var + eps)                 # EUP slot, nearly free
        scale = gb_ref[0:1, :] * inv_std               # gamma / std
        ss_ref[0:1, :] = scale
        ss_ref[1:2, :] = gb_ref[1:2, :] - scale * mean  # beta - scale * mean


def _bn_apply_kernel(x_ref, ss_ref, o_ref):
    """Pass 2: y = scale * x + shift (normalization + affine folded)."""
    o_ref[...] = x_ref[...] * ss_ref[0:1, :] + ss_ref[1:2, :]


def _pick_m_tile(M, F, target_bytes=2 << 20):
    """Largest multiple-of-8 divisor of M whose (m_tile, F) f32 block stays
    under target_bytes; falls back to the full extent (always a legal block)."""
    if M % 8 != 0:
        return M
    max_rows = max(8, target_bytes // (F * 4))
    limit = int(min(M, max_rows))
    best = None
    for t in range(8, limit + 1, 8):
        if M % t == 0:
            best = t
    return best if best is not None else M


def reshape_batchnorm_pallas(x, gamma, beta, *, eps=1e-5, m_tile=None):
    """x: (B, N, F) float32; gamma/beta: (F,) float32."""
    B, N, F = x.shape
    M = B * N

    xf = x.reshape(M, F)                       # free reshape (no transpose)
    gb = jnp.stack([gamma, beta], axis=0)      # (2, F): features on lanes

    if m_tile is None:
        m_tile = _pick_m_tile(M, F)
    assert M % m_tile == 0, "m_tile must evenly divide B*N"
    assert m_tile == M or m_tile % 8 == 0, "partial m_tile must be a multiple of 8"
    num_tiles = M // m_tile

    block_bytes = m_tile * F * 4
    # Explicit scoped-VMEM budget sized to the tiles with headroom, capped at
    # the v7x physical limit so the same kernel is portable across generations.
    vmem_limit = int(min(64 << 20, max(16 << 20, 8 * block_bytes)))

    # ---- Pass 1: per-feature stats -> folded (scale, shift) -----------------
    scale_shift = pl.pallas_call(
        functools.partial(_bn_stats_kernel,
                          m_tile=m_tile, inv_m=1.0 / M, eps=eps),
        out_shape=jax.ShapeDtypeStruct((2, F), jnp.float32),
        grid_spec=pltpu.PrefetchScalarGridSpec(
            num_scalar_prefetch=0,
            grid=(num_tiles,),
            in_specs=[
                pl.BlockSpec((m_tile, F), lambda i: (i, 0)),   # x row tile
                pl.BlockSpec((2, F), lambda i: (0, 0)),        # [gamma; beta]
            ],
            out_specs=pl.BlockSpec((2, F), lambda i: (0, 0)),  # [scale; shift]
            scratch_shapes=[pltpu.VMEM((2, F), jnp.float32)],
        ),
        compiler_params=pltpu.CompilerParams(
            dimension_semantics=("arbitrary",),        # reduction over row tiles
            vmem_limit_bytes=vmem_limit),
    )(xf, gb)

    # ---- Pass 2: normalize + affine (rows independent -> parallel) ----------
    out = pl.pallas_call(
        _bn_apply_kernel,
        out_shape=jax.ShapeDtypeStruct((M, F), jnp.float32),
        grid_spec=pltpu.PrefetchScalarGridSpec(
            num_scalar_prefetch=0,
            grid=(num_tiles,),
            in_specs=[
                pl.BlockSpec((m_tile, F), lambda i: (i, 0)),   # x row tile
                pl.BlockSpec((2, F), lambda i: (0, 0)),        # [scale; shift]
            ],
            out_specs=pl.BlockSpec((m_tile, F), lambda i: (i, 0)),
        ),
        compiler_params=pltpu.CompilerParams(
            dimension_semantics=("parallel",),
            vmem_limit_bytes=vmem_limit),
    )(xf, scale_shift)

    return out.reshape(B, N, F)


def reshape_batchnorm_ref(x, gamma, beta, *, eps=1e-5):
    # Pure-JAX mirror of the PyTorch forward (training-mode BatchNorm1d).
    B, N, F = x.shape
    xf = x.reshape(B * N, F)
    mean = jnp.mean(xf, axis=0, keepdims=True)
    var = jnp.mean((xf - mean) ** 2, axis=0, keepdims=True)   # biased
    y = (xf - mean) / jnp.sqrt(var + eps) * gamma[None, :] + beta[None, :]
    return y.reshape(B, N, F)


if __name__ == "__main__":
    B, N, F = 2, 8, 32   # (batch, num, feat) -- forward requires a 3-D input

    key = jax.random.PRNGKey(0)
    kx, kg, kb = jax.random.split(key, 3)

    # Non-zero mean exercises the numerically-robust variance path.
    x = jax.random.normal(kx, (B, N, F), dtype=jnp.float32) + 3.0
    gamma = jax.random.uniform(kg, (F,), jnp.float32, 0.5, 1.5)
    beta = jax.random.uniform(kb, (F,), jnp.float32, -0.5, 0.5)

    ref = reshape_batchnorm_ref(x, gamma, beta)

    # Auto tile choice (single row tile at this tiny size) ...
    out_auto = jax.block_until_ready(reshape_batchnorm_pallas(x, gamma, beta))
    # ... and a forced small tile to exercise the multi-tile accumulation path.
    out_tiled = jax.block_until_ready(
        reshape_batchnorm_pallas(x, gamma, beta, m_tile=8))

    assert out_auto.shape == (B, N, F)
    assert jnp.allclose(out_auto, ref, atol=1e-4, rtol=1e-4), "auto-tile mismatch"
    assert jnp.allclose(out_tiled, ref, atol=1e-4, rtol=1e-4), "multi-tile mismatch"

    print("KERNEL_OK")
</pallas_src>

<mosaic_0001>
module attributes {stable_mosaic.version = 11 : i64} {
  func.func @_bn_stats_kernel(%arg0: i32, %arg1: memref<16x32xf32, #tpu.memory_space<vmem>>, %arg2: memref<2x32xf32, #tpu.memory_space<vmem>>, %arg3: memref<2x32xf32, #tpu.memory_space<vmem>>, %arg4: memref<2x32xf32, #tpu.memory_space<vmem>>) attributes {dimension_semantics = [#tpu.dimension_semantics<arbitrary>], iteration_bounds = array<i64: 1>, scalar_prefetch = 0 : i64, scratch_operands = 1 : i64, tpu.core_type = #tpu.core_type<tc>, window_params = [{transform_indices = @transform_0, window_bounds = array<i64: 16, 32>}, {pipeline_mode = #tpu.pipeline_mode<synchronous>, transform_indices = @transform_1, window_bounds = array<i64: 2, 32>}, {pipeline_mode = #tpu.pipeline_mode<synchronous>, transform_indices = @transform_2, window_bounds = array<i64: 2, 32>}]} {
    %c0_i32 = arith.constant 0 : i32
    %0 = arith.cmpi eq, %arg0, %c0_i32 : i32
    %1 = arith.extui %0 : i1 to i32
    %c0_i32_0 = arith.constant 0 : i32
    %2 = arith.cmpi ne, %1, %c0_i32_0 : i32
    scf.if %2 {
      %cst_19 = arith.constant 0.000000e+00 : f32
      %36 = vector.broadcast %cst_19 : f32 to vector<2x32xf32>
      %c0_20 = arith.constant 0 : index
      %c0_21 = arith.constant 0 : index
      %37 = vector.load %arg4[%c0_20, %c0_21] : memref<2x32xf32, #tpu.memory_space<vmem>>, vector<2x32xf32>
      tpu.vector_store %arg4[%c0_20, %c0_21], %36 {strides = array<i32>} : memref<2x32xf32, #tpu.memory_space<vmem>>, vector<2x32xf32>,
    } else {
    }
    %c0 = arith.constant 0 : index
    %c0_1 = arith.constant 0 : index
    %3 = vector.load %arg1[%c0, %c0_1] : memref<16x32xf32, #tpu.memory_space<vmem>>, vector<16x32xf32>
    %cst = arith.constant dense<0.000000e+00> : vector<32xf32>
    %4 = vector.multi_reduction <add>, %3, %cst [0] : vector<16x32xf32> to vector<32xf32>
    %5 = vector.shape_cast %4 : vector<32xf32> to vector<1x32xf32>
    %cst_2 = arith.constant 6.250000e-02 : f32
    %6 = vector.broadcast %cst_2 : f32 to vector<1x32xf32>
    %7 = arith.mulf %5, %6 : vector<1x32xf32>
    %8 = vector.broadcast %7 : vector<1x32xf32> to vector<16x32xf32>
    %9 = arith.subf %3, %8 : vector<16x32xf32>
    %10 = arith.mulf %9, %9 : vector<16x32xf32>
    %cst_3 = arith.constant dense<0.000000e+00> : vector<32xf32>
    %11 = vector.multi_reduction <add>, %10, %cst_3 [0] : vector<16x32xf32> to vector<32xf32>
    %12 = vector.shape_cast %11 : vector<32xf32> to vector<1x32xf32>
    %13 = arith.sitofp %arg0 : i32 to f32
    %c0_4 = arith.constant 0 : index
    %c0_5 = arith.constant 0 : index
    %14 = vector.load %arg4[%c0_4, %c0_5] : memref<2x32xf32, #tpu.memory_space<vmem>>, vector<1x32xf32>
    %15 = arith.subf %7, %14 : vector<1x32xf32>
    %c0_6 = arith.constant 0 : index
    %c0_7 = arith.constant 0 : index
    %16 = vector.load %arg4[%c0_6, %c0_7] : memref<2x32xf32, #tpu.memory_space<vmem>>, vector<1x32xf32>
    %cst_8 = arith.constant 1.000000e+00 : f32
    %17 = arith.addf %13, %cst_8 : f32
    %cst_9 = arith.constant 1.000000e+00 : f32
    %18 = arith.divf %cst_9, %17 : f32
    %19 = vector.broadcast %18 : f32 to vector<1x32xf32>
    %20 = arith.mulf %15, %19 : vector<1x32xf32>
    %21 = arith.addf %16, %20 : vector<1x32xf32>
    %c0_10 = arith.constant 0 : index
    %c0_11 = arith.constant 0 : index
    %22 = vector.load %arg4[%c0_10, %c0_11] : memref<2x32xf32, #tpu.memory_space<vmem>>, vector<1x32xf32>
    tpu.vector_store %arg4[%c0_10, %c0_11], %21 {strides = array<i32>} : memref<2x32xf32, #tpu.memory_space<vmem>>, vector<1x32xf32>,
    %c1 = arith.constant 1 : index
    %c0_12 = arith.constant 0 : index
    %23 = vector.load %arg4[%c1, %c0_12] : memref<2x32xf32, #tpu.memory_space<vmem>>, vector<1x32xf32>
    %24 = arith.mulf %15, %15 : vector<1x32xf32>
    %cst_13 = arith.constant 1.600000e+01 : f32
    %25 = arith.mulf %13, %cst_13 : f32
    %cst_14 = arith.constant 1.000000e+00 : f32
    %26 = arith.addf %13, %cst_14 : f32
    %27 = arith.divf %25, %26 : f32
    %28 = vector.broadcast %27 : f32 to vector<1x32xf32>
    %29 = arith.mulf %24, %28 : vector<1x32xf32>
    %30 = arith.addf %12, %29 : vector<1x32xf32>
    %31 = arith.addf %23, %30 : vector<1x32xf32>
    %c1_15 = arith.constant 1 : index
    %c0_16 = arith.constant 0 : index
    %32 = vector.load %arg4[%c1_15, %c0_16] : memref<2x32xf32, #tpu.memory_space<vmem>>, vector<1x32xf32>
    tpu.vector_store %arg4[%c1_15, %c0_16], %31 {strides = array<i32>} : memref<2x32xf32, #tpu.memory_space<vmem>>, vector<1x32xf32>,
    %c0_i32_17 = arith.constant 0 : i32
    %33 = arith.cmpi eq, %arg0, %c0_i32_17 : i32
    %34 = arith.extui %33 : i1 to i32
    %c0_i32_18 = arith.constant 0 : i32
    %35 = arith.cmpi ne, %34, %c0_i32_18 : i32
    scf.if %35 {
      %c0_19 = arith.constant 0 : index
      %c0_20 = arith.constant 0 : index
      %36 = vector.load %arg4[%c0_19, %c0_20] : memref<2x32xf32, #tpu.memory_space<vmem>>, vector<1x32xf32>
      %c1_21 = arith.constant 1 : index
      %c0_22 = arith.constant 0 : index
      %37 = vector.load %arg4[%c1_21, %c0_22] : memref<2x32xf32, #tpu.memory_space<vmem>>, vector<1x32xf32>
      %cst_23 = arith.constant 6.250000e-02 : f32
      %38 = vector.broadcast %cst_23 : f32 to vector<1x32xf32>
      %39 = arith.mulf %37, %38 : vector<1x32xf32>
      %cst_24 = arith.constant 9.99999974E-6 : f32
      %40 = vector.broadcast %cst_24 : f32 to vector<1x32xf32>
      %41 = arith.addf %39, %40 : vector<1x32xf32>
      %42 = math.rsqrt %41 : vector<1x32xf32>
      %c0_25 = arith.constant 0 : index
      %c0_26 = arith.constant 0 : index
      %43 = vector.load %arg2[%c0_25, %c0_26] : memref<2x32xf32, #tpu.memory_space<vmem>>, vector<1x32xf32>
      %44 = arith.mulf %43, %42 : vector<1x32xf32>
      %c0_27 = arith.constant 0 : index
      %c0_28 = arith.constant 0 : index
      %45 = vector.load %arg3[%c0_27, %c0_28] : memref<2x32xf32, #tpu.memory_space<vmem>>, vector<1x32xf32>
      tpu.vector_store %arg3[%c0_27, %c0_28], %44 {strides = array<i32>} : memref<2x32xf32, #tpu.memory_space<vmem>>, vector<1x32xf32>,
      %c1_29 = arith.constant 1 : index
      %c0_30 = arith.constant 0 : index
      %46 = vector.load %arg2[%c1_29, %c0_30] : memref<2x32xf32, #tpu.memory_space<vmem>>, vector<1x32xf32>
      %47 = arith.mulf %44, %36 : vector<1x32xf32>
      %48 = arith.subf %46, %47 : vector<1x32xf32>
      %c1_31 = arith.constant 1 : index
      %c0_32 = arith.constant 0 : index
      %49 = vector.load %arg3[%c1_31, %c0_32] : memref<2x32xf32, #tpu.memory_space<vmem>>, vector<1x32xf32>
      tpu.vector_store %arg3[%c1_31, %c0_32], %48 {strides = array<i32>} : memref<2x32xf32, #tpu.memory_space<vmem>>, vector<1x32xf32>,
    } else {
    }
    return
  }
  func.func @transform_0(%arg0: i32) -> (i32, i32) {
    %c0_i32 = arith.constant 0 : i32
    %c0_i32_0 = arith.constant 0 : i32
    return %arg0, %c0_i32 : i32, i32
  }
  func.func @transform_1(%arg0: i32) -> (i32, i32) {
    %c0_i32 = arith.constant 0 : i32
    %c0_i32_0 = arith.constant 0 : i32
    %c0_i32_1 = arith.constant 0 : i32
    return %c0_i32, %c0_i32_0 : i32, i32
  }
  func.func @transform_2(%arg0: i32) -> (i32, i32) {
    %c0_i32 = arith.constant 0 : i32
    %c0_i32_0 = arith.constant 0 : i32
    %c0_i32_1 = arith.constant 0 : i32
    return %c0_i32, %c0_i32_0 : i32, i32
  }
}

</mosaic_0001>

<llo_original>
// kernel: tpu_custom_call.1
$region0: #{tpu_custom_call.1}
  #allocation0 [shape = 'u32[]', space=smem, size = 0x4, offset = 0x4, fixed_abs, tag = 'smem constant byte address 0x4 - core index']
  #allocation1 [shape = 'u32[144,128]{1,0:T(1,128)}', space=vmem, size = 0x12000, scoped, tag = 'internal scratch']
  #allocation2 [shape = 'f32[2,32]{1,0:T(2,128)}', space=vmem, size = 0x400, scoped, tag = 'scratch operand']
  %s0 = inlined_call_operand.hbm [shape: f32[16,32], index: 0, kind: input, shape index: {}]
  %s1 = inlined_call_operand.hbm [shape: f32[2,32], index: 1, kind: input, shape index: {}]
  %s2 = inlined_call_operand.hbm [shape: f32[2,32], index: 2, kind: output, shape index: {}]
  %s3 = sld [smem:[#allocation0]]
  $region34: #{tpu_custom_call.1} parent=0
    _
  %s5 = ssub.s32 1, %s3
  %s6 = scalar_select 0, %s5, %s3
  $region1: #{tpu_custom_call.1} parent=0
    #allocation3 [shape = 'u8[8192]{0}', space=vmem, size = 0x2000, scoped, tag = 'input window, operand 0, single buffered']
    #allocation4 [shape = 's32[1]{0}', space=sflag, size = 0x4, scoped, tag = 'scoped memory for tpu_custom_call.1']
    #allocation5 [shape = 's32[1]{0}', space=sflag, size = 0x4, scoped, tag = 'scoped memory for tpu_custom_call.1']
    #allocation6 [shape = 'u8[1024]{0}', space=vmem, size = 0x400, scoped, tag = 'input window, operand 1, single buffered']
    #allocation7 [shape = 's32[1]{0}', space=sflag, size = 0x4, scoped, tag = 'scoped memory for tpu_custom_call.1']
    #allocation8 [shape = 'u8[1024]{0}', space=vmem, size = 0x400, scoped, tag = 'output window, operand 0, single buffered']
    %7 = vsyncpa [#allocation4], 0
    %8 = vsyncpa [#allocation7], 0
    %9 = vsyncpa [#allocation5], 0
    // Predicated region
    $region2: #{tpu_custom_call.1} parent=1 // pred_check
      _
    $region3: #{tpu_custom_call.1} parent=1 // pred_check_branch
      %11 = sbr.rel (0) target = $region5
    $region4: #{tpu_custom_call.1} parent=1 // pred_region
      %s13 = ssub.s32 256, 256
      %14 = vsyncadd [#allocation4], %s13
      %s15 = sshll.u32 [#allocation3], 4
      %s16 = int_to_ptr.vmem [resolvable:$true] %s15
      %21 = dma.hbm_to_vmem [thread:$0]  %s0, 256, %s16, [#allocation4], 128, 128, 8
    $region5: #{tpu_custom_call.1} parent=1 // pred_fallthru
      _
    // Predicated region
    $region6: #{tpu_custom_call.1} parent=1 // pred_check
      _
    $region7: #{tpu_custom_call.1} parent=1 // pred_check_branch
      %23 = sbr.rel (0) target = $region9
    $region8: #{tpu_custom_call.1} parent=1 // pred_region
      %s25 = ssub.s32 32, 32
      %26 = vsyncadd [#allocation7], %s25
      %s28 = sshll.u32 [#allocation6], 4
      %s29 = int_to_ptr.vmem [resolvable:$true] %s28
      %31 = dma.hbm_to_vmem [thread:$0]  %s1, 32, %s29, [#allocation7]
    $region9: #{tpu_custom_call.1} parent=1 // pred_fallthru
      _
    // Predicated region
    $region10: #{tpu_custom_call.1} parent=1 // pred_check
      _
    $region11: #{tpu_custom_call.1} parent=1 // pred_check_branch
      %33 = sbr.rel (0) target = $region13
    $region12: #{tpu_custom_call.1} parent=1 // pred_region
      %34 = dma.done [#allocation4], 256
    $region13: #{tpu_custom_call.1} parent=1 // pred_fallthru
      _
    // Predicated region
    $region14: #{tpu_custom_call.1} parent=1 // pred_check
      _
    $region15: #{tpu_custom_call.1} parent=1 // pred_check_branch
      %36 = sbr.rel (0) target = $region17
    $region16: #{tpu_custom_call.1} parent=1 // pred_region
      %37 = dma.done [#allocation7], 32
    $region17: #{tpu_custom_call.1} parent=1 // pred_fallthru
      _
    %p38 = scmp.eq.s32.totalorder 0, 0
    // Predicated region
    $region18: #{tpu_custom_call.1} parent=1 // pred_check
      %p39 = pneg %p38
    $region19: #{tpu_custom_call.1} parent=1 // pred_check_branch
      %41 = sbr.rel (%p39) target = $region21
    $region20: #{tpu_custom_call.1} parent=1 // pred_region
      %vm42 = vcmask 254976
      %43 = vst.msk [vmem:[#allocation2] sm:$0x3] %vm42, 0.0
    $region21: #{tpu_custom_call.1} parent=1 // pred_fallthru
      _
    %v44 = vld [vmem:[#allocation3] sm:$0xff]
    %v45 = vld [vmem:[#allocation3 + $0x8] sm:$0xff]
    %vm46 = vcmask 261120
    %v47 = vsel %vm46, %v44, 0.0
    %v48 = vsel %vm46, %v45, 0.0
    %v49 = vadd.f32 %v47, %v48
    %v50 = vrot.slane %v49, 4
    %v51 = vadd.f32 %v49, %v50
    %v52 = vrot.slane %v51, 2
    %v53 = vadd.f32 %v51, %v52
    %v54 = vrot.slane %v53, 1
    %v55 = vadd.f32 %v53, %v54
    %v56 = vmul.f32 %v55, 0.0625
    %v57 = vsub.f32 %v44, %v56
    %v58 = vsub.f32 %v45, %v56
    %v59 = vmul.f32 %v57, %v57
    %v60 = vmul.f32 %v58, %v58
    %v61 = vsel %vm46, %v59, 0.0
    %v62 = vsel %vm46, %v60, 0.0
    %v63 = vadd.f32 %v61, %v62
    %v64 = vrot.slane %v63, 4
    %v65 = vadd.f32 %v63, %v64
    %v66 = vrot.slane %v65, 2
    %v67 = vadd.f32 %v65, %v66
    %v68 = vrot.slane %v67, 1
    %v69 = vadd.f32 %v67, %v68
    %s70 = scvt.s32.f32 0
    %v71 = vld [vmem:[#allocation2] sm:$0x1]
    %v72 = vsub.f32 %v56, %v71
    %s73 = sadd.f32 %s70, 1.0
    %v74 = vstv %s73
    %v75 = vrcp.pop %v74
    %s76 = vtos %v75
    %v77 = vstv %s76
    %v78 = vmul.f32 %v72, %v77
    %v79 = vadd.f32 %v71, %v78
    %vm80 = vcmask 253952
    %81 = vst.msk [vmem:[#allocation2] sm:$0x1] %vm80, %v79
    %v82 = vld [vmem:[#allocation2 + $0x1] sm:$0x1]
    %v83 = vmul.f32 %v72, %v72
    %s84 = smul.f32 %s70, 16.0
    %v85 = vstv %s73
    %v86 = vrcp.pop %v85
    %s87 = vtos %v86
    %s88 = smul.f32 %s84, %s87
    %v89 = vstv %s88
    %v90 = vmul.f32 %v83, %v89
    %v91 = vadd.f32 %v69, %v90
    %v92 = vadd.f32 %v82, %v91
    %93 = vst.msk [vmem:[#allocation2 + $0x1] sm:$0x1] %vm80, %v92
    // Predicated region
    $region22: #{tpu_custom_call.1} parent=1 // pred_check
      %p94 = pneg %p38
    $region23: #{tpu_custom_call.1} parent=1 // pred_check_branch
      %96 = sbr.rel (%p94) target = $region25
    $region24: #{tpu_custom_call.1} parent=1 // pred_region
      %v97 = vld [vmem:[#allocation2] sm:$0x1]
      %v98 = vld [vmem:[#allocation2 + $0x1] sm:$0x1]
      %v99 = vmul.f32 %v98, 0.0625
      %v100 = vadd.f32 %v99, 1e-05
      %v101 = vrsqrt.pop %v100
      %v102 = vld [vmem:[#allocation6] sm:$0x1]
      %v103 = vmul.f32 %v102, %v101
      %104 = vst.msk [vmem:[#allocation8] sm:$0x1] %vm80, %v103
      %v105 = vld [vmem:[#allocation6 + $0x1] sm:$0x1]
      %v106 = vmul.f32 %v103, %v97
      %v107 = vsub.f32 %v105, %v106
      %108 = vst.msk [vmem:[#allocation8 + $0x1] sm:$0x1] %vm80, %v107
    $region25: #{tpu_custom_call.1} parent=1 // pred_fallthru
      _
    // Predicated region
    $region26: #{tpu_custom_call.1} parent=1 // pred_check
      _
    $region27: #{tpu_custom_call.1} parent=1 // pred_check_branch
      %110 = sbr.rel (0) target = $region29
    $region28: #{tpu_custom_call.1} parent=1 // pred_region
      %s112 = ssub.s32 32, 32
      %113 = vsyncadd [#allocation5], %s112
      %s115 = sshll.u32 [#allocation8], 4
      %s116 = int_to_ptr.vmem [resolvable:$true] %s115
      %118 = dma.vmem_to_hbm [thread:$0]  %s116, 32, %s2, [#allocation5]
    $region29: #{tpu_custom_call.1} parent=1 // pred_fallthru
      _
    // Predicated region
    $region30: #{tpu_custom_call.1} parent=1 // pred_check
      _
    $region31: #{tpu_custom_call.1} parent=1 // pred_check_branch
      %120 = sbr.rel (0) target = $region33
    $region32: #{tpu_custom_call.1} parent=1 // pred_region
      %121 = dma.done [#allocation5], 32
    $region33: #{tpu_custom_call.1} parent=1 // pred_fallthru
      _
    %122 = vsyncpa [#allocation4], 1
    %123 = vsyncpa [#allocation7], 1
    %124 = vsyncpa [#allocation5], 1

</llo_original>
